<compile_context>
chip_gen: v7x
topology: tpu7x:2x2x1
jax: 0.10.0
libtpu: 0.0.40
codegen_flags: <defaults>
</compile_context>

<pallas_src>
import functools
import math

import jax
import jax.numpy as jnp
import numpy as np
from jax import lax
from jax.experimental import pallas as pl
from jax.experimental.pallas import tpu as pltpu


def _round_up(x, m):
    return (x + m - 1) // m * m


# ----------------------------------------------------------------------------
# Pallas kernel: one (batch, voxel-tile) grid step.
# ----------------------------------------------------------------------------
def _voxel_obs_kernel(ext_ref,        # SMEM [B, 12]  rows of extrinsics[:3, :4]
                      depth_hi_ref,   # VMEM [1, M_PAD, K_PAD] bf16 (hi part)
                      depth_lo_ref,   # VMEM [1, M_PAD, K_PAD] bf16 (lo part)
                      occ_ref,        # VMEM [1, 1, NT] int8 occupancy (0/1)
                      mask_ref,       # VMEM [1, 1, NT] f32 out: observability
                      ray_ref,        # VMEM [1, 1, NT] f32 out: ray-bounce depth
                      *, ih, iw, hfov_deg, voxel_size, origin, dims,
                      n_tile, depth_transposed):
    b = pl.program_id(0)
    t = pl.program_id(1)
    w, l, h = dims
    ox, oy, oz = origin
    vs = float(voxel_size)
    lh = l * h

    e = [ext_ref[b, k] for k in range(12)]       # 12 scalar SMEM reads

    # ---- voxel centroid coordinates, generated in-kernel -------------------
    # Flattened voxel index n = ix*(L*H) + iy*H + iz.  Exact decomposition:
    # int32 iota, float-reciprocal candidate quotient, then exact int32 fixup
    # (the quotients are small, so the candidate is always within +-1).
    base = t * n_tile
    n_i = lax.broadcasted_iota(jnp.int32, (1, n_tile), 1) + base   # [1, NT]

    ixc = jnp.floor(n_i.astype(jnp.float32) * (1.0 / lh)).astype(jnp.int32)
    rem = n_i - ixc * lh
    ixc = jnp.where(rem >= lh, ixc + 1, jnp.where(rem < 0, ixc - 1, ixc))
    rem = n_i - ixc * lh
    iyc = jnp.floor(rem.astype(jnp.float32) * (1.0 / h)).astype(jnp.int32)
    rz = rem - iyc * h
    iyc = jnp.where(rz >= h, iyc + 1, jnp.where(rz < 0, iyc - 1, iyc))
    izc = rem - iyc * h

    wx = ox + (ixc.astype(jnp.float32) + 0.5) * vs          # [1, NT]
    wy = oy + (iyc.astype(jnp.float32) + 0.5) * vs
    wz = oz + (izc.astype(jnp.float32) + 0.5) * vs

    # ---- project_3d_points: cam = T[:3,:3] @ world + T[:3,3] ---------------
    cx = e[0] * wx + e[1] * wy + e[2] * wz + e[3]
    cy = e[4] * wx + e[5] * wy + e[6] * wz + e[7]
    cz = e[8] * wx + e[9] * wy + e[10] * wz + e[11]

    # ---- project_3d_camera_points_to_2d_pixels -----------------------------
    focal = iw / (2.0 * math.tan(math.radians(hfov_deg) / 2.0))
    cz_safe = jnp.maximum(cz, 1e-6)              # guards z<=0 AND tiny positive z
    p0 = cx * focal / cz_safe + ih * 0.5         # column (bounded by IH)
    p1 = cy * focal / cz_safe + iw * 0.5         # row    (bounded by IW)

    in_bounds = (p0 > 0) & (p0 < ih) & (p1 > 0) & (p1 < iw) & (cz > 0)
    p0i = jnp.where(in_bounds, p0, 0.0).astype(jnp.int32)   # trunc == .int()
    p1i = jnp.where(in_bounds, p1, 0.0).astype(jnp.int32)

    # ---- two-stage gather: ray[n] = depth[p1i[n], p0i[n]] -------------------
    # depth_mat layout is chosen in the wrapper so the MXU contracts over the
    # LARGER image dim (K) and stage 2 selects over the SMALLER one (M).
    if depth_transposed:                 # depth_mat[c, r] = depth[r, c]
        k_idx, m_idx = p1i, p0i
    else:                                # depth_mat[r, c] = depth[r, c]
        k_idx, m_idx = p0i, p1i

    d_hi = depth_hi_ref[0]               # [M_PAD, K_PAD] bf16
    d_lo = depth_lo_ref[0]
    m_pad, k_pad = d_hi.shape

    # stage 1 (MXU): one-hot over the contraction dim, built directly in bf16.
    iota_k = lax.broadcasted_iota(jnp.int32, (k_pad, n_tile), 0)
    onehot = (iota_k == k_idx).astype(jnp.bfloat16)          # [K_PAD, NT]
    gathered = (jnp.dot(d_hi, onehot, preferred_element_type=jnp.float32)
                + jnp.dot(d_lo, onehot, preferred_element_type=jnp.float32))
    # gathered[m, n] == depth_mat[m, k_idx[n]]  (to ~2^-16 relative accuracy)

    # stage 2 (VPU + XLU): select the remaining image dim, sublane-reduce.
    iota_m = lax.broadcasted_iota(jnp.int32, (m_pad, n_tile), 0)
    sel = iota_m == m_idx                                    # [M_PAD, NT] bool
    ray = jnp.sum(jnp.where(sel, gathered, 0.0), axis=0, keepdims=True)  # [1,NT]

    # ---- observability mask -------------------------------------------------
    tol = vs * 0.5
    observed = jnp.logical_and(cz <= ray + tol, in_bounds).astype(jnp.float32)
    mask = jnp.maximum(observed, occ_ref[0].astype(jnp.float32))

    mask_ref[0] = mask
    ray_ref[0] = ray


# ----------------------------------------------------------------------------
# Wrapper
# ----------------------------------------------------------------------------
def voxel_3d_observability(voxel_data, voxel_size, origin,
                           extrinsics4f, depth_image, hfov_deg, *, n_tile=None):
    b, c, w, l, h = voxel_data.shape
    _, _, ih, iw = depth_image.shape
    n_vox = w * l * h

    # ---- orient depth so the MXU contracts over max(IH, IW) ----------------
    depth_f = depth_image.astype(jnp.float32)[:, 0]          # [B, IH, IW]
    depth_transposed = iw < ih
    if depth_transposed:
        depth_mat = jnp.transpose(depth_f, (0, 2, 1))        # [B, IW, IH]
    else:
        depth_mat = depth_f                                   # [B, IH, IW]
    m_dim, k_dim = depth_mat.shape[1], depth_mat.shape[2]
    m_pad = _round_up(m_dim, 8)            # sublane dim (stage-2 select/reduce)
    k_pad = _round_up(k_dim, 128)          # lane / MXU contraction dim
    depth_mat = jnp.pad(depth_mat,
                        ((0, 0), (0, m_pad - m_dim), (0, k_pad - k_dim)))

    # bf16 hi/lo split (two bf16 matmuls recover ~f32 precision on the gather).
    depth_hi = depth_mat.astype(jnp.bfloat16)
    depth_lo = (depth_mat - depth_hi.astype(jnp.float32)).astype(jnp.bfloat16)

    # ---- voxel-tile size: budget the per-tile in-kernel intermediates ------
    if n_tile is None:
        # onehot(bf16)+iota_k(i32) on K, gathered/where(f32)+iota_m(i32) on M.
        bytes_per_lane = 6 * k_pad + 16 * m_pad
        n_tile = max(int((12 * 1024 * 1024) // bytes_per_lane), 256)
    n_tile = min(n_tile, 8192)
    n_tile = min(n_tile, _round_up(n_vox, 128))
    n_tile = _round_up(max(n_tile, 128), 128)
    n_pad = _round_up(n_vox, n_tile)
    n_tiles = n_pad // n_tile

    # Extrinsics rows [:3, :4] as a small SMEM table.
    ext = extrinsics4f.astype(jnp.float32)[:, :3, :].reshape(b, 12)

    # Pre-reduced occupancy (max over channels > 0.2), carried as int8.
    occ = (jnp.max(voxel_data.astype(jnp.float32), axis=1) > 0.2)
    occ = occ.reshape(b, 1, n_vox).astype(jnp.int8)
    occ = jnp.pad(occ, ((0, 0), (0, 0), (0, n_pad - n_vox)))

    kernel = functools.partial(
        _voxel_obs_kernel, ih=ih, iw=iw, hfov_deg=float(hfov_deg),
        voxel_size=float(voxel_size),
        origin=(float(origin[0]), float(origin[1]), float(origin[2])),
        dims=(w, l, h), n_tile=n_tile, depth_transposed=depth_transposed)

    mask, ray = pl.pallas_call(
        kernel,
        out_shape=(jax.ShapeDtypeStruct((b, 1, n_pad), jnp.float32),
                   jax.ShapeDtypeStruct((b, 1, n_pad), jnp.float32)),
        grid=(b, n_tiles),
        in_specs=[
            # extrinsics: whole array resident in SMEM (scalar reads).
            pl.BlockSpec(memory_space=pltpu.MemorySpace.SMEM),
            # depth stays VMEM-resident across the voxel-tile axis.
            pl.BlockSpec((1, m_pad, k_pad), lambda bi, ti: (bi, 0, 0)),
            pl.BlockSpec((1, m_pad, k_pad), lambda bi, ti: (bi, 0, 0)),
            pl.BlockSpec((1, 1, n_tile), lambda bi, ti: (bi, 0, ti)),
        ],
        out_specs=[
            pl.BlockSpec((1, 1, n_tile), lambda bi, ti: (bi, 0, ti)),
            pl.BlockSpec((1, 1, n_tile), lambda bi, ti: (bi, 0, ti)),
        ],
        compiler_params=pltpu.CompilerParams(
            dimension_semantics=("parallel", "parallel"),
            vmem_limit_bytes=48 * 1024 * 1024),   # v7x-safe (<64 MiB physical)
    )(ext, depth_hi, depth_lo, occ)

    observability_grid = mask[:, :, :n_vox].reshape(b, 1, w, l, h)
    voxel_ray_bounce_depths = ray[:, :, :n_vox].reshape(b, 1, w, l, h)
    return observability_grid, voxel_ray_bounce_depths


# ----------------------------------------------------------------------------
# Pure-JAX reference (mirrors the PyTorch forward) for a correctness check
# ----------------------------------------------------------------------------
def _centroid_coord_grid(w, l, h, voxel_size, origin):
    xs = origin[0] + (jnp.arange(w, dtype=jnp.float32) + 0.5) * voxel_size
    ys = origin[1] + (jnp.arange(l, dtype=jnp.float32) + 0.5) * voxel_size
    zs = origin[2] + (jnp.arange(h, dtype=jnp.float32) + 0.5) * voxel_size
    gx, gy, gz = jnp.meshgrid(xs, ys, zs, indexing="ij")
    return jnp.stack([gx, gy, gz], axis=0).reshape(3, w * l * h)   # [3, N]


def reference_forward(voxel_data, voxel_size, origin,
                      extrinsics4f, depth_image, hfov_deg):
    b, c, w, l, h = voxel_data.shape
    _, _, ih, iw = depth_image.shape
    n_vox = w * l * h

    coords = _centroid_coord_grid(w, l, h, voxel_size, origin)            # [3, N]
    R = extrinsics4f[:, :3, :3].astype(jnp.float32)
    t = extrinsics4f[:, :3, 3].astype(jnp.float32)
    cam = jnp.einsum("bij,jn->bin", R, coords) + t[:, :, None]            # [B, 3, N]
    cx, cy, cz = cam[:, 0], cam[:, 1], cam[:, 2]

    focal = iw / (2.0 * math.tan(math.radians(hfov_deg) / 2.0))
    czs = jnp.where(cz > 0.0, cz, 1.0)
    p0 = cx * focal / czs + ih * 0.5
    p1 = cy * focal / czs + iw * 0.5
    ib = (p0 > 0) & (p0 < ih) & (p1 > 0) & (p1 < iw) & (cz > 0)
    p0i = (p0 * ib.astype(jnp.float32)).astype(jnp.int32)
    p1i = (p1 * ib.astype(jnp.float32)).astype(jnp.int32)
    flat = p1i * iw + p0i                                                 # [B, N]

    depth_flat = depth_image.astype(jnp.float32).reshape(b, -1)
    ray = jnp.take_along_axis(depth_flat, flat, axis=1)                   # [B, N]

    observed = (cz <= ray + voxel_size / 2.0) & ib
    occupied = voxel_data.reshape(b, c, n_vox).max(axis=1) > 0.2
    mask = (observed | occupied).astype(jnp.float32)
    return mask.reshape(b, 1, w, l, h), ray.reshape(b, 1, w, l, h)


# ----------------------------------------------------------------------------
if __name__ == "__main__":
    key = jax.random.PRNGKey(0)
    k1, k2 = jax.random.split(key, 2)

    B, C, W, L, H = 2, 4, 6, 5, 7          # N = 210 (exercises padding)
    IH = IW = 16
    hfov_deg = 60.0
    voxel_size = 0.25
    origin = (-1.0, -1.0, 0.0)

    depth_image = jax.random.uniform(k1, (B, 1, IH, IW), jnp.float32, 0.5, 4.0)
    voxel_data = jax.random.uniform(k2, (B, C, W, L, H), jnp.float32, 0.0, 0.25)

    # Deterministic extrinsics: identity rotation (batch 0) and an exact 90-deg
    # z-rotation (batch 1), plus translations placing voxels in front of cam.
    R0 = jnp.eye(3, dtype=jnp.float32)
    R1 = jnp.array([[0., -1., 0.], [1., 0., 0.], [0., 0., 1.]], jnp.float32)
    extrinsics4f = jnp.zeros((B, 4, 4), jnp.float32).at[:, 3, 3].set(1.0)
    extrinsics4f = extrinsics4f.at[0, :3, :3].set(R0).at[1, :3, :3].set(R1)
    extrinsics4f = extrinsics4f.at[0, :3, 3].set(
        jnp.array([0.10, -0.05, 2.0], jnp.float32))
    extrinsics4f = extrinsics4f.at[1, :3, 3].set(
        jnp.array([-0.20, 0.10, 2.5], jnp.float32))

    obs_ref, ray_ref = reference_forward(
        voxel_data, voxel_size, origin, extrinsics4f, depth_image, hfov_deg)

    # Exercise the multi-tile path (n_tile=128 -> 2 tiles) and the default
    # heuristic path (single 256-wide tile here).
    for tile in (128, None):
        obs_grid, ray_depths = voxel_3d_observability(
            voxel_data, voxel_size, origin, extrinsics4f, depth_image,
            hfov_deg, n_tile=tile)
        jax.block_until_ready((obs_grid, ray_depths))

        # bf16 hi/lo gather: |err| <= ~2^-16 * depth (~6e-5 at depth 4.0), so
        # the ray tolerance is explicitly relaxed relative to exact f32.
        np.testing.assert_allclose(np.asarray(ray_depths), np.asarray(ray_ref),
                                   rtol=1e-4, atol=1e-4)
        assert float(jnp.mean(jnp.abs(obs_grid - obs_ref))) < 5e-3

    print("KERNEL_OK")
</pallas_src>

<mosaic_0001>
module attributes {stable_mosaic.version = 11 : i64} {
  func.func @_voxel_obs_kernel(%arg0: i32, %arg1: i32, %arg2: memref<2x12xf32, #tpu.memory_space<smem>>, %arg3: memref<1x16x128xbf16, #tpu.memory_space<vmem>>, %arg4: memref<1x16x128xbf16, #tpu.memory_space<vmem>>, %arg5: memref<1x1x128xi8, #tpu.memory_space<vmem>>, %arg6: memref<1x1x128xf32, #tpu.memory_space<vmem>>, %arg7: memref<1x1x128xf32, #tpu.memory_space<vmem>>) attributes {dimension_semantics = [#tpu.dimension_semantics<parallel>, #tpu.dimension_semantics<parallel>], iteration_bounds = array<i64: 2, 2>, scalar_prefetch = 0 : i64, scratch_operands = 0 : i64, tpu.core_type = #tpu.core_type<tc>, window_params = [{transform_indices = @transform_0, window_bounds = array<i64: 2, 12>}, {transform_indices = @transform_1, window_bounds = array<i64: 1, 16, 128>}, {transform_indices = @transform_2, window_bounds = array<i64: 1, 16, 128>}, {transform_indices = @transform_3, window_bounds = array<i64: 1, 1, 128>}, {transform_indices = @transform_4, window_bounds = array<i64: 1, 1, 128>}, {transform_indices = @transform_5, window_bounds = array<i64: 1, 1, 128>}]} {
    %0 = arith.index_cast %arg0 : i32 to index
    %c0 = arith.constant 0 : index
    %1 = memref.load %arg2[%0, %c0] : memref<2x12xf32, #tpu.memory_space<smem>>
    %2 = arith.index_cast %arg0 : i32 to index
    %c1 = arith.constant 1 : index
    %3 = memref.load %arg2[%2, %c1] : memref<2x12xf32, #tpu.memory_space<smem>>
    %4 = arith.index_cast %arg0 : i32 to index
    %c2 = arith.constant 2 : index
    %5 = memref.load %arg2[%4, %c2] : memref<2x12xf32, #tpu.memory_space<smem>>
    %6 = arith.index_cast %arg0 : i32 to index
    %c3 = arith.constant 3 : index
    %7 = memref.load %arg2[%6, %c3] : memref<2x12xf32, #tpu.memory_space<smem>>
    %8 = arith.index_cast %arg0 : i32 to index
    %c4 = arith.constant 4 : index
    %9 = memref.load %arg2[%8, %c4] : memref<2x12xf32, #tpu.memory_space<smem>>
    %10 = arith.index_cast %arg0 : i32 to index
    %c5 = arith.constant 5 : index
    %11 = memref.load %arg2[%10, %c5] : memref<2x12xf32, #tpu.memory_space<smem>>
    %12 = arith.index_cast %arg0 : i32 to index
    %c6 = arith.constant 6 : index
    %13 = memref.load %arg2[%12, %c6] : memref<2x12xf32, #tpu.memory_space<smem>>
    %14 = arith.index_cast %arg0 : i32 to index
    %c7 = arith.constant 7 : index
    %15 = memref.load %arg2[%14, %c7] : memref<2x12xf32, #tpu.memory_space<smem>>
    %16 = arith.index_cast %arg0 : i32 to index
    %c8 = arith.constant 8 : index
    %17 = memref.load %arg2[%16, %c8] : memref<2x12xf32, #tpu.memory_space<smem>>
    %18 = arith.index_cast %arg0 : i32 to index
    %c9 = arith.constant 9 : index
    %19 = memref.load %arg2[%18, %c9] : memref<2x12xf32, #tpu.memory_space<smem>>
    %20 = arith.index_cast %arg0 : i32 to index
    %c10 = arith.constant 10 : index
    %21 = memref.load %arg2[%20, %c10] : memref<2x12xf32, #tpu.memory_space<smem>>
    %22 = arith.index_cast %arg0 : i32 to index
    %c11 = arith.constant 11 : index
    %23 = memref.load %arg2[%22, %c11] : memref<2x12xf32, #tpu.memory_space<smem>>
    %c128_i32 = arith.constant 128 : i32
    %24 = arith.muli %arg1, %c128_i32 : i32
    %25 = tpu.iota {dimensions = array<i32: 1>} : vector<1x128xi32>
    %26 = vector.broadcast %24 : i32 to vector<1x128xi32>
    %27 = arith.addi %25, %26 : vector<1x128xi32>
    %28 = arith.sitofp %27 : vector<1x128xi32> to vector<1x128xf32>
    %cst = arith.constant 0.0285714287 : f32
    %29 = vector.broadcast %cst : f32 to vector<1x128xf32>
    %30 = arith.mulf %28, %29 : vector<1x128xf32>
    %31 = math.floor %30 : vector<1x128xf32>
    %32 = arith.fptosi %31 : vector<1x128xf32> to vector<1x128xi32>
    %c35_i32 = arith.constant 35 : i32
    %33 = vector.broadcast %c35_i32 : i32 to vector<1x128xi32>
    %34 = arith.muli %32, %33 : vector<1x128xi32>
    %35 = arith.subi %27, %34 : vector<1x128xi32>
    %c35_i32_0 = arith.constant 35 : i32
    %36 = vector.broadcast %c35_i32_0 : i32 to vector<1x128xi32>
    %37 = arith.cmpi sge, %35, %36 : vector<1x128xi32>
    %c1_i32 = arith.constant 1 : i32
    %38 = vector.broadcast %c1_i32 : i32 to vector<1x128xi32>
    %39 = arith.addi %32, %38 : vector<1x128xi32>
    %c0_i32 = arith.constant 0 : i32
    %40 = vector.broadcast %c0_i32 : i32 to vector<1x128xi32>
    %41 = arith.cmpi slt, %35, %40 : vector<1x128xi32>
    %c1_i32_1 = arith.constant 1 : i32
    %42 = vector.broadcast %c1_i32_1 : i32 to vector<1x128xi32>
    %43 = arith.subi %32, %42 : vector<1x128xi32>
    %44 = arith.select %41, %43, %32 : vector<1x128xi1>, vector<1x128xi32>
    %45 = arith.select %37, %39, %44 : vector<1x128xi1>, vector<1x128xi32>
    %c35_i32_2 = arith.constant 35 : i32
    %46 = vector.broadcast %c35_i32_2 : i32 to vector<1x128xi32>
    %47 = arith.muli %45, %46 : vector<1x128xi32>
    %48 = arith.subi %27, %47 : vector<1x128xi32>
    %49 = arith.sitofp %48 : vector<1x128xi32> to vector<1x128xf32>
    %cst_3 = arith.constant 0.142857149 : f32
    %50 = vector.broadcast %cst_3 : f32 to vector<1x128xf32>
    %51 = arith.mulf %49, %50 : vector<1x128xf32>
    %52 = math.floor %51 : vector<1x128xf32>
    %53 = arith.fptosi %52 : vector<1x128xf32> to vector<1x128xi32>
    %c7_i32 = arith.constant 7 : i32
    %54 = vector.broadcast %c7_i32 : i32 to vector<1x128xi32>
    %55 = arith.muli %53, %54 : vector<1x128xi32>
    %56 = arith.subi %48, %55 : vector<1x128xi32>
    %c7_i32_4 = arith.constant 7 : i32
    %57 = vector.broadcast %c7_i32_4 : i32 to vector<1x128xi32>
    %58 = arith.cmpi sge, %56, %57 : vector<1x128xi32>
    %c1_i32_5 = arith.constant 1 : i32
    %59 = vector.broadcast %c1_i32_5 : i32 to vector<1x128xi32>
    %60 = arith.addi %53, %59 : vector<1x128xi32>
    %c0_i32_6 = arith.constant 0 : i32
    %61 = vector.broadcast %c0_i32_6 : i32 to vector<1x128xi32>
    %62 = arith.cmpi slt, %56, %61 : vector<1x128xi32>
    %c1_i32_7 = arith.constant 1 : i32
    %63 = vector.broadcast %c1_i32_7 : i32 to vector<1x128xi32>
    %64 = arith.subi %53, %63 : vector<1x128xi32>
    %65 = arith.select %62, %64, %53 : vector<1x128xi1>, vector<1x128xi32>
    %66 = arith.select %58, %60, %65 : vector<1x128xi1>, vector<1x128xi32>
    %c7_i32_8 = arith.constant 7 : i32
    %67 = vector.broadcast %c7_i32_8 : i32 to vector<1x128xi32>
    %68 = arith.muli %66, %67 : vector<1x128xi32>
    %69 = arith.subi %48, %68 : vector<1x128xi32>
    %70 = arith.sitofp %45 : vector<1x128xi32> to vector<1x128xf32>
    %cst_9 = arith.constant 5.000000e-01 : f32
    %71 = vector.broadcast %cst_9 : f32 to vector<1x128xf32>
    %72 = arith.addf %70, %71 : vector<1x128xf32>
    %cst_10 = arith.constant 2.500000e-01 : f32
    %73 = vector.broadcast %cst_10 : f32 to vector<1x128xf32>
    %74 = arith.mulf %72, %73 : vector<1x128xf32>
    %cst_11 = arith.constant -1.000000e+00 : f32
    %75 = vector.broadcast %cst_11 : f32 to vector<1x128xf32>
    %76 = arith.addf %75, %74 : vector<1x128xf32>
    %77 = arith.sitofp %66 : vector<1x128xi32> to vector<1x128xf32>
    %cst_12 = arith.constant 5.000000e-01 : f32
    %78 = vector.broadcast %cst_12 : f32 to vector<1x128xf32>
    %79 = arith.addf %77, %78 : vector<1x128xf32>
    %cst_13 = arith.constant 2.500000e-01 : f32
    %80 = vector.broadcast %cst_13 : f32 to vector<1x128xf32>
    %81 = arith.mulf %79, %80 : vector<1x128xf32>
    %cst_14 = arith.constant -1.000000e+00 : f32
    %82 = vector.broadcast %cst_14 : f32 to vector<1x128xf32>
    %83 = arith.addf %82, %81 : vector<1x128xf32>
    %84 = arith.sitofp %69 : vector<1x128xi32> to vector<1x128xf32>
    %cst_15 = arith.constant 5.000000e-01 : f32
    %85 = vector.broadcast %cst_15 : f32 to vector<1x128xf32>
    %86 = arith.addf %84, %85 : vector<1x128xf32>
    %cst_16 = arith.constant 2.500000e-01 : f32
    %87 = vector.broadcast %cst_16 : f32 to vector<1x128xf32>
    %88 = arith.mulf %86, %87 : vector<1x128xf32>
    %cst_17 = arith.constant 0.000000e+00 : f32
    %89 = vector.broadcast %cst_17 : f32 to vector<1x128xf32>
    %90 = arith.addf %89, %88 : vector<1x128xf32>
    %91 = vector.broadcast %1 : f32 to vector<1x128xf32>
    %92 = arith.mulf %91, %76 : vector<1x128xf32>
    %93 = vector.broadcast %3 : f32 to vector<1x128xf32>
    %94 = arith.mulf %93, %83 : vector<1x128xf32>
    %95 = arith.addf %92, %94 : vector<1x128xf32>
    %96 = vector.broadcast %5 : f32 to vector<1x128xf32>
    %97 = arith.mulf %96, %90 : vector<1x128xf32>
    %98 = arith.addf %95, %97 : vector<1x128xf32>
    %99 = vector.broadcast %7 : f32 to vector<1x128xf32>
    %100 = arith.addf %98, %99 : vector<1x128xf32>
    %101 = vector.broadcast %9 : f32 to vector<1x128xf32>
    %102 = arith.mulf %101, %76 : vector<1x128xf32>
    %103 = vector.broadcast %11 : f32 to vector<1x128xf32>
    %104 = arith.mulf %103, %83 : vector<1x128xf32>
    %105 = arith.addf %102, %104 : vector<1x128xf32>
    %106 = vector.broadcast %13 : f32 to vector<1x128xf32>
    %107 = arith.mulf %106, %90 : vector<1x128xf32>
    %108 = arith.addf %105, %107 : vector<1x128xf32>
    %109 = vector.broadcast %15 : f32 to vector<1x128xf32>
    %110 = arith.addf %108, %109 : vector<1x128xf32>
    %111 = vector.broadcast %17 : f32 to vector<1x128xf32>
    %112 = arith.mulf %111, %76 : vector<1x128xf32>
    %113 = vector.broadcast %19 : f32 to vector<1x128xf32>
    %114 = arith.mulf %113, %83 : vector<1x128xf32>
    %115 = arith.addf %112, %114 : vector<1x128xf32>
    %116 = vector.broadcast %21 : f32 to vector<1x128xf32>
    %117 = arith.mulf %116, %90 : vector<1x128xf32>
    %118 = arith.addf %115, %117 : vector<1x128xf32>
    %119 = vector.broadcast %23 : f32 to vector<1x128xf32>
    %120 = arith.addf %118, %119 : vector<1x128xf32>
    %cst_18 = arith.constant 9.99999997E-7 : f32
    %121 = vector.broadcast %cst_18 : f32 to vector<1x128xf32>
    %122 = arith.maximumf %120, %121 : vector<1x128xf32>
    %cst_19 = arith.constant 13.8564062 : f32
    %123 = vector.broadcast %cst_19 : f32 to vector<1x128xf32>
    %124 = arith.mulf %100, %123 : vector<1x128xf32>
    %125 = arith.divf %124, %122 : vector<1x128xf32>
    %cst_20 = arith.constant 8.000000e+00 : f32
    %126 = vector.broadcast %cst_20 : f32 to vector<1x128xf32>
    %127 = arith.addf %125, %126 : vector<1x128xf32>
    %cst_21 = arith.constant 13.8564062 : f32
    %128 = vector.broadcast %cst_21 : f32 to vector<1x128xf32>
    %129 = arith.mulf %110, %128 : vector<1x128xf32>
    %130 = arith.divf %129, %122 : vector<1x128xf32>
    %cst_22 = arith.constant 8.000000e+00 : f32
    %131 = vector.broadcast %cst_22 : f32 to vector<1x128xf32>
    %132 = arith.addf %130, %131 : vector<1x128xf32>
    %cst_23 = arith.constant 0.000000e+00 : f32
    %133 = vector.broadcast %cst_23 : f32 to vector<1x128xf32>
    %134 = arith.cmpf ogt, %127, %133 : vector<1x128xf32>
    %cst_24 = arith.constant 1.600000e+01 : f32
    %135 = vector.broadcast %cst_24 : f32 to vector<1x128xf32>
    %136 = arith.cmpf olt, %127, %135 : vector<1x128xf32>
    %137 = arith.andi %134, %136 : vector<1x128xi1>
    %cst_25 = arith.constant 0.000000e+00 : f32
    %138 = vector.broadcast %cst_25 : f32 to vector<1x128xf32>
    %139 = arith.cmpf ogt, %132, %138 : vector<1x128xf32>
    %140 = arith.andi %137, %139 : vector<1x128xi1>
    %cst_26 = arith.constant 1.600000e+01 : f32
    %141 = vector.broadcast %cst_26 : f32 to vector<1x128xf32>
    %142 = arith.cmpf olt, %132, %141 : vector<1x128xf32>
    %143 = arith.andi %140, %142 : vector<1x128xi1>
    %cst_27 = arith.constant 0.000000e+00 : f32
    %144 = vector.broadcast %cst_27 : f32 to vector<1x128xf32>
    %145 = arith.cmpf ogt, %120, %144 : vector<1x128xf32>
    %146 = arith.andi %143, %145 : vector<1x128xi1>
    %cst_28 = arith.constant 0.000000e+00 : f32
    %147 = vector.broadcast %cst_28 : f32 to vector<1x128xf32>
    %148 = arith.select %146, %127, %147 : vector<1x128xi1>, vector<1x128xf32>
    %149 = arith.fptosi %148 : vector<1x128xf32> to vector<1x128xi32>
    %cst_29 = arith.constant 0.000000e+00 : f32
    %150 = vector.broadcast %cst_29 : f32 to vector<1x128xf32>
    %151 = arith.select %146, %132, %150 : vector<1x128xi1>, vector<1x128xf32>
    %152 = arith.fptosi %151 : vector<1x128xf32> to vector<1x128xi32>
    %c0_30 = arith.constant 0 : index
    %c0_31 = arith.constant 0 : index
    %c0_32 = arith.constant 0 : index
    %153 = vector.load %arg3[%c0_30, %c0_31, %c0_32] : memref<1x16x128xbf16, #tpu.memory_space<vmem>>, vector<1x16x128xbf16>
    %154 = vector.shape_cast %153 : vector<1x16x128xbf16> to vector<16x128xbf16>
    %c0_33 = arith.constant 0 : index
    %c0_34 = arith.constant 0 : index
    %c0_35 = arith.constant 0 : index
    %155 = vector.load %arg4[%c0_33, %c0_34, %c0_35] : memref<1x16x128xbf16, #tpu.memory_space<vmem>>, vector<1x16x128xbf16>
    %156 = vector.shape_cast %155 : vector<1x16x128xbf16> to vector<16x128xbf16>
    %157 = tpu.iota {dimensions = array<i32: 0>} : vector<128x128xi32>
    %158 = vector.broadcast %149 : vector<1x128xi32> to vector<128x128xi32>
    %159 = arith.cmpi eq, %157, %158 : vector<128x128xi32>
    %160 = arith.extui %159 : vector<128x128xi1> to vector<128x128xi32>
    %161 = arith.sitofp %160 : vector<128x128xi32> to vector<128x128xf32>
    %162 = arith.truncf %161 : vector<128x128xf32> to vector<128x128xbf16>
    %cst_36 = arith.constant dense<0.000000e+00> : vector<16x128xf32>
    %163 = tpu.matmul %154, %162, %cst_36 {dimension_numbers = #tpu.dot_dimension_numbers<[1], [0], [0], [1], [0, 0, 1, 1], [], []>} : vector<16x128xbf16>, vector<128x128xbf16>, vector<16x128xf32> -> vector<16x128xf32>
    %cst_37 = arith.constant dense<0.000000e+00> : vector<16x128xf32>
    %164 = tpu.matmul %156, %162, %cst_37 {dimension_numbers = #tpu.dot_dimension_numbers<[1], [0], [0], [1], [0, 0, 1, 1], [], []>} : vector<16x128xbf16>, vector<128x128xbf16>, vector<16x128xf32> -> vector<16x128xf32>
    %165 = arith.addf %163, %164 : vector<16x128xf32>
    %166 = tpu.iota {dimensions = array<i32: 0>} : vector<16x128xi32>
    %167 = vector.broadcast %152 : vector<1x128xi32> to vector<16x128xi32>
    %168 = arith.cmpi eq, %166, %167 : vector<16x128xi32>
    %cst_38 = arith.constant 0.000000e+00 : f32
    %169 = vector.broadcast %cst_38 : f32 to vector<16x128xf32>
    %170 = arith.select %168, %165, %169 : vector<16x128xi1>, vector<16x128xf32>
    %cst_39 = arith.constant dense<0.000000e+00> : vector<128xf32>
    %171 = vector.multi_reduction <add>, %170, %cst_39 [0] : vector<16x128xf32> to vector<128xf32>
    %172 = vector.shape_cast %171 : vector<128xf32> to vector<1x128xf32>
    %cst_40 = arith.constant 1.250000e-01 : f32
    %173 = vector.broadcast %cst_40 : f32 to vector<1x128xf32>
    %174 = arith.addf %172, %173 : vector<1x128xf32>
    %175 = arith.cmpf ole, %120, %174 : vector<1x128xf32>
    %176 = arith.andi %175, %146 : vector<1x128xi1>
    %177 = arith.extui %176 : vector<1x128xi1> to vector<1x128xi32>
    %178 = arith.sitofp %177 : vector<1x128xi32> to vector<1x128xf32>
    %c0_41 = arith.constant 0 : index
    %c0_42 = arith.constant 0 : index
    %c0_43 = arith.constant 0 : index
    %179 = vector.load %arg5[%c0_41, %c0_42, %c0_43] : memref<1x1x128xi8, #tpu.memory_space<vmem>>, vector<1x1x128xi8>
    %180 = vector.shape_cast %179 : vector<1x1x128xi8> to vector<1x128xi8>
    %181 = arith.sitofp %180 : vector<1x128xi8> to vector<1x128xf32>
    %182 = arith.maximumf %178, %181 : vector<1x128xf32>
    %c0_44 = arith.constant 0 : index
    %c0_45 = arith.constant 0 : index
    %c0_46 = arith.constant 0 : index
    %183 = vector.load %arg6[%c0_44, %c0_45, %c0_46] : memref<1x1x128xf32, #tpu.memory_space<vmem>>, vector<1x1x128xf32>
    %184 = vector.shape_cast %183 : vector<1x1x128xf32> to vector<1x128xf32>
    %185 = vector.shape_cast %182 : vector<1x128xf32> to vector<1x1x128xf32>
    tpu.vector_store %arg6[%c0_44, %c0_45, %c0_46], %185 {strides = array<i32>} : memref<1x1x128xf32, #tpu.memory_space<vmem>>, vector<1x1x128xf32>,
    %c0_47 = arith.constant 0 : index
    %c0_48 = arith.constant 0 : index
    %c0_49 = arith.constant 0 : index
    %186 = vector.load %arg7[%c0_47, %c0_48, %c0_49] : memref<1x1x128xf32, #tpu.memory_space<vmem>>, vector<1x1x128xf32>
    %187 = vector.shape_cast %186 : vector<1x1x128xf32> to vector<1x128xf32>
    %188 = vector.shape_cast %172 : vector<1x128xf32> to vector<1x1x128xf32>
    tpu.vector_store %arg7[%c0_47, %c0_48, %c0_49], %188 {strides = array<i32>} : memref<1x1x128xf32, #tpu.memory_space<vmem>>, vector<1x1x128xf32>,
    return
  }
  func.func @transform_0(%arg0: i32, %arg1: i32) -> (i32, i32) {
    %c0_i32 = arith.constant 0 : i32
    %c0_i32_0 = arith.constant 0 : i32
    %c0_i32_1 = arith.constant 0 : i32
    return %c0_i32, %c0_i32_0 : i32, i32
  }
  func.func @transform_1(%arg0: i32, %arg1: i32) -> (i32, i32, i32) {
    %c0_i32 = arith.constant 0 : i32
    %c0_i32_0 = arith.constant 0 : i32
    %c0_i32_1 = arith.constant 0 : i32
    return %arg0, %c0_i32, %c0_i32_0 : i32, i32, i32
  }
  func.func @transform_2(%arg0: i32, %arg1: i32) -> (i32, i32, i32) {
    %c0_i32 = arith.constant 0 : i32
    %c0_i32_0 = arith.constant 0 : i32
    %c0_i32_1 = arith.constant 0 : i32
    return %arg0, %c0_i32, %c0_i32_0 : i32, i32, i32
  }
  func.func @transform_3(%arg0: i32, %arg1: i32) -> (i32, i32, i32) {
    %c0_i32 = arith.constant 0 : i32
    %c0_i32_0 = arith.constant 0 : i32
    return %arg0, %c0_i32, %arg1 : i32, i32, i32
  }
  func.func @transform_4(%arg0: i32, %arg1: i32) -> (i32, i32, i32) {
    %c0_i32 = arith.constant 0 : i32
    %c0_i32_0 = arith.constant 0 : i32
    return %arg0, %c0_i32, %arg1 : i32, i32, i32
  }
  func.func @transform_5(%arg0: i32, %arg1: i32) -> (i32, i32, i32) {
    %c0_i32 = arith.constant 0 : i32
    %c0_i32_0 = arith.constant 0 : i32
    return %arg0, %c0_i32, %arg1 : i32, i32, i32
  }
}

</mosaic_0001>

<llo_original>
// kernel: tpu_custom_call.1
$region0: #{tpu_custom_call.1}
  #allocation0 [shape = 'u32[]', space=smem, size = 0x4, offset = 0x4, fixed_abs, tag = 'smem constant byte address 0x4 - core index']
  #allocation1 [shape = 'u32[144,128]{1,0:T(1,128)}', space=vmem, size = 0x12000, scoped, tag = 'internal scratch']
  %s0 = inlined_call_operand.vmem [shape: f32[2,12], index: 0, kind: input, shape index: {}]
  %s1 = inlined_call_operand.hbm [shape: bf16[2,16,128], index: 1, kind: input, shape index: {}]
  %s2 = inlined_call_operand.hbm [shape: bf16[2,16,128], index: 2, kind: input, shape index: {}]
  %s3 = inlined_call_operand.vmem [shape: s8[2,1,256], index: 3, kind: input, shape index: {}]
  %s4 = inlined_call_operand.hbm [shape: f32[2,1,256], index: 4, kind: output, shape index: {0}]
  %s5 = inlined_call_operand.hbm [shape: f32[2,1,256], index: 5, kind: output, shape index: {1}]
  %6 = xla_tuple %s4, %s5
  %s7 = sld [smem:[#allocation0]]
  $region69: #{tpu_custom_call.1} parent=0
    _
  %s9 = ssub.s32 1, %s7
  %s10 = scalar_select 0, %s9, %s7
  $region1: #{tpu_custom_call.1} parent=0
    #allocation2 [shape = 'u8[1024]{0}', space=smem, size = 0x400, scoped, tag = 'input window, operand 0, single buffered']
    #allocation3 [shape = 's32[2]{0}', space=sflag, size = 0x8, scoped, tag = 'scoped memory for tpu_custom_call.1']
    #allocation4 [shape = 's32[2]{0}', space=sflag, size = 0x8, scoped, tag = 'scoped memory for tpu_custom_call.1']
    #allocation5 [shape = 's32[2]{0}', space=sflag, size = 0x8, scoped, tag = 'scoped memory for tpu_custom_call.1']
    #allocation6 [shape = 'u8[8192]{0}', space=vmem, size = 0x2000, scoped, tag = 'input window, operand 1']
    #allocation7 [shape = 'u8[8192]{0}', space=vmem, size = 0x2000, scoped, tag = 'input window, operand 2']
    #allocation8 [shape = 's32[2]{0}', space=sflag, size = 0x8, scoped, tag = 'scoped memory for tpu_custom_call.1']
    #allocation9 [shape = 'u8[1024]{0}', space=vmem, size = 0x400, scoped, tag = 'output window, operand 0']
    #allocation10 [shape = 'u8[1024]{0}', space=vmem, size = 0x400, scoped, tag = 'output window, operand 1']
    #allocation11 [shape = 's32[2]{0}', space=sflag, size = 0x8, scoped, tag = 'scoped memory for tpu_custom_call.1']
    %11 = vsyncpa [#allocation5], 0
    %12 = vsyncpa [#allocation3], 0
    %s13 = scalar_lea.sflag [#allocation3], 1
    %14 = vsyncpa %s13, 0
    %15 = vsyncpa [#allocation8], 0
    %s16 = scalar_lea.sflag [#allocation8], 1
    %17 = vsyncpa %s16, 0
    %18 = vsyncpa [#allocation4], 0
    %s19 = scalar_lea.sflag [#allocation4], 1
    %20 = vsyncpa %s19, 0
    %21 = vsyncpa [#allocation11], 0
    %s22 = scalar_lea.sflag [#allocation11], 1
    %23 = vsyncpa %s22, 0
    loop: start=0, step=1, limit=6
    $region2: #{tpu_custom_call.1} parent=1 // loop_pre_header
      _
    $region3: #{tpu_custom_call.1} parent=1 // loop_header
      %s25 = sphi 0, %s29
      %p26 = scmp.ge.s32.totalorder %s25, 6
      %s32 = sphi 0, %s44
      %s33 = sphi 0, %s40
      %s34 = sphi 0, %s32
      %s35 = sphi 0, %s33
      %s36 = sphi 0, %s34
      %s37 = sphi 0, %s35
      %s45 = sphi 0, %s45
      %s47 = sphi 0, %s45
      %s48 = sphi 0, %s47
      %s62 = sphi 0, %s48
      %s68 = sphi 0, %s70
      %s71 = sphi 0, %s68
      %s72 = sphi 0, %s71
      %s88 = sphi 0, %s72
      %s94 = sphi 0, %s96
      %s97 = sphi 0, %s94
      %s98 = sphi 0, %s97
      %s114 = sphi 0, %s98
      %s122 = sphi 0, %s124
      %s125 = sphi 0, %s122
      %s126 = sphi 0, %s125
      %s142 = sphi 0, %s126
      %s150 = sphi 0, %s152
      %s153 = sphi 0, %s150
      %s154 = sphi 0, %s153
      %s170 = sphi 0, %s154
      %s178 = sphi 0, %s180
      %s181 = sphi 0, %s178
      %s182 = sphi 0, %s181
      %s198 = sphi 0, %s182
    $region4: #{tpu_custom_call.1} parent=1 // loop_header_branch
      %28 = sbr.rel (%p26) target = $region8
    $region5: #{tpu_custom_call.1} parent=1 // loop_body
      %s30 = ssub.s32 %s25, 1
      %s31 = ssub.s32 %s25, 2
      %s38 = sadd.s32 1, %s33
      %p39 = scmp.ge.s32.totalorder %s38, 2
      %s40 = scalar_select %p39, 0, %s38
      %s41 = sadd.s32 1, %s32
      %s42 = scalar_select %p39, %s41, %s32
      %p43 = scmp.ge.s32.totalorder %s42, 2
      %s44 = scalar_select %p43, 0, %s42
      %s46 = sadd.s32 %s45, 1
      %p49 = scmp.eq.s32.totalorder %s25, 3
      %p50 = scmp.ne.s32.totalorder %s45, %s47
      %p51 = scmp.eq.s32.totalorder %s25, 0
      %p52 = por %p50, %p51
      %p53 = scmp.ne.s32.totalorder %s45, %s47
      %p54 = scmp.eq.s32.totalorder %s30, 3
      %p55 = por %p53, %p54
      %p56 = scmp.ne.s32.totalorder %s47, %s48
      %p57 = scmp.eq.s32.totalorder %s30, 0
      %p58 = por %p56, %p57
      %p59 = scmp.ne.s32.totalorder %s47, %s48
      %p60 = scmp.eq.s32.totalorder %s31, 3
      %p61 = por %p59, %p60
      %p63 = scmp.ne.s32.totalorder %s48, %s62
      %p64 = scmp.eq.s32.totalorder %s31, 0
      %p65 = por %p63, %p64
      %s66 = ssub.s32 %s32, %s44
      %p67 = scmp.eq.s32.totalorder %s66, 0
      %s69 = sadd.s32 %s68, 1
      %s70 = scalar_select %p67, %s68, %s69
      %p73 = pneg %p67
      %p74 = scmp.eq.s32.totalorder %s25, 3
      %p75 = por %p73, %p74
      %p76 = scmp.ne.s32.totalorder %s68, %s71
      %p77 = scmp.eq.s32.totalorder %s25, 0
      %p78 = por %p76, %p77
      %p79 = scmp.ne.s32.totalorder %s68, %s71
      %p80 = scmp.eq.s32.totalorder %s30, 3
      %p81 = por %p79, %p80
      %p82 = scmp.ne.s32.totalorder %s71, %s72
      %p83 = scmp.eq.s32.totalorder %s30, 0
      %p84 = por %p82, %p83
      %p85 = scmp.ne.s32.totalorder %s71, %s72
      %p86 = scmp.eq.s32.totalorder %s31, 3
      %p87 = por %p85, %p86
      %p89 = scmp.ne.s32.totalorder %s72, %s88
      %p90 = scmp.eq.s32.totalorder %s31, 0
      %p91 = por %p89, %p90
      %s92 = ssub.s32 %s32, %s44
      %p93 = scmp.eq.s32.totalorder %s92, 0
      %s95 = sadd.s32 %s94, 1
      %s96 = scalar_select %p93, %s94, %s95
      %p99 = pneg %p93
      %p100 = scmp.eq.s32.totalorder %s25, 3
      %p101 = por %p99, %p100
      %p102 = scmp.ne.s32.totalorder %s94, %s97
      %p103 = scmp.eq.s32.totalorder %s25, 0
      %p104 = por %p102, %p103
      %p105 = scmp.ne.s32.totalorder %s94, %s97
      %p106 = scmp.eq.s32.totalorder %s30, 3
      %p107 = por %p105, %p106
      %p108 = scmp.ne.s32.totalorder %s97, %s98
      %p109 = scmp.eq.s32.totalorder %s30, 0
      %p110 = por %p108, %p109
      %p111 = scmp.ne.s32.totalorder %s97, %s98
      %p112 = scmp.eq.s32.totalorder %s31, 3
      %p113 = por %p111, %p112
      %p115 = scmp.ne.s32.totalorder %s98, %s114
      %p116 = scmp.eq.s32.totalorder %s31, 0
      %p117 = por %p115, %p116
      %s118 = ssub.s32 %s32, %s44
      %s119 = ssub.s32 %s33, %s40
      %s120 = sor.u32 %s118, %s119
      %p121 = scmp.eq.s32.totalorder %s120, 0
      %s123 = sadd.s32 %s122, 1
      %s124 = scalar_select %p121, %s122, %s123
      %p127 = pneg %p121
      %p128 = scmp.eq.s32.totalorder %s25, 3
      %p129 = por %p127, %p128
      %p130 = scmp.ne.s32.totalorder %s122, %s125
      %p131 = scmp.eq.s32.totalorder %s25, 0
      %p132 = por %p130, %p131
      %p133 = scmp.ne.s32.totalorder %s122, %s125
      %p134 = scmp.eq.s32.totalorder %s30, 3
      %p135 = por %p133, %p134
      %p136 = scmp.ne.s32.totalorder %s125, %s126
      %p137 = scmp.eq.s32.totalorder %s30, 0
      %p138 = por %p136, %p137
      %p139 = scmp.ne.s32.totalorder %s125, %s126
      %p140 = scmp.eq.s32.totalorder %s31, 3
      %p141 = por %p139, %p140
      %p143 = scmp.ne.s32.totalorder %s126, %s142
      %p144 = scmp.eq.s32.totalorder %s31, 0
      %p145 = por %p143, %p144
      %s146 = ssub.s32 %s32, %s44
      %s147 = ssub.s32 %s33, %s40
      %s148 = sor.u32 %s146, %s147
      %p149 = scmp.eq.s32.totalorder %s148, 0
      %s151 = sadd.s32 %s150, 1
      %s152 = scalar_select %p149, %s150, %s151
      %p155 = pneg %p149
      %p156 = scmp.eq.s32.totalorder %s25, 3
      %p157 = por %p155, %p156
      %p158 = scmp.ne.s32.totalorder %s150, %s153
      %p159 = scmp.eq.s32.totalorder %s25, 0
      %p160 = por %p158, %p159
      %p161 = scmp.ne.s32.totalorder %s150, %s153
      %p162 = scmp.eq.s32.totalorder %s30, 3
      %p163 = por %p161, %p162
      %p164 = scmp.ne.s32.totalorder %s153, %s154
      %p165 = scmp.eq.s32.totalorder %s30, 0
      %p166 = por %p164, %p165
      %p167 = scmp.ne.s32.totalorder %s153, %s154
      %p168 = scmp.eq.s32.totalorder %s31, 3
      %p169 = por %p167, %p168
      %p171 = scmp.ne.s32.totalorder %s154, %s170
      %p172 = scmp.eq.s32.totalorder %s31, 0
      %p173 = por %p171, %p172
      %s174 = ssub.s32 %s32, %s44
      %s175 = ssub.s32 %s33, %s40
      %s176 = sor.u32 %s174, %s175
      %p177 = scmp.eq.s32.totalorder %s176, 0
      %s179 = sadd.s32 %s178, 1
      %s180 = scalar_select %p177, %s178, %s179
      %p183 = pneg %p177
      %p184 = scmp.eq.s32.totalorder %s25, 3
      %p185 = por %p183, %p184
      %p186 = scmp.ne.s32.totalorder %s178, %s181
      %p187 = scmp.eq.s32.totalorder %s25, 0
      %p188 = por %p186, %p187
      %p189 = scmp.ne.s32.totalorder %s178, %s181
      %p190 = scmp.eq.s32.totalorder %s30, 3
      %p191 = por %p189, %p190
      %p192 = scmp.ne.s32.totalorder %s181, %s182
      %p193 = scmp.eq.s32.totalorder %s30, 0
      %p194 = por %p192, %p193
      %p195 = scmp.ne.s32.totalorder %s181, %s182
      %p196 = scmp.eq.s32.totalorder %s31, 3
      %p197 = por %p195, %p196
      %p199 = scmp.ne.s32.totalorder %s182, %s198
      %p200 = scmp.eq.s32.totalorder %s31, 0
      %p201 = por %p199, %p200
      %p202 = scmp.le.s32.totalorder 1, %s25
      %p203 = scmp.lt.s32.totalorder %s25, 5
      %p204 = pnand %p202, %p203
      %p205 = pneg %p204
      // Predicated region
      $region9: #{tpu_custom_call.1} parent=5 // pred_check
        _
      $region10: #{tpu_custom_call.1} parent=5 // pred_check_branch
        %207 = sbr.rel (%p204) target = $region12
      $region11: #{tpu_custom_call.1} parent=5 // pred_region
        %s208 = ssub.s32 %s25, 1
        // Predicated region
        $region13: #{tpu_custom_call.1} parent=11 // pred_check
          %p209 = pneg %p58
        $region14: #{tpu_custom_call.1} parent=11 // pred_check_branch
          %211 = sbr.rel (%p209) target = $region16
        $region15: #{tpu_custom_call.1} parent=11 // pred_region
          %s213 = ssub.s32 32, 32
          %214 = vsyncadd [#allocation5], %s213
          %s216 = sshll.u32 %s0, 4
          %s217 = int_to_ptr.vmem [resolvable:$true] %s216
          %219 = dma.vmem_to_smem %s217, 32, [#allocation2], [#allocation5]
        $region16: #{tpu_custom_call.1} parent=11 // pred_fallthru
          _
      $region12: #{tpu_custom_call.1} parent=5 // pred_fallthru
        _
      %p220 = scmp.lt.s32.totalorder %s25, 4
      // Predicated region
      $region17: #{tpu_custom_call.1} parent=5 // pred_check
        %p221 = pneg %p220
      $region18: #{tpu_custom_call.1} parent=5 // pred_check_branch
        %223 = sbr.rel (%p221) target = $region20
      $region19: #{tpu_custom_call.1} parent=5 // pred_region
        // Predicated region
        $region21: #{tpu_custom_call.1} parent=19 // pred_check
          %p224 = pneg %p78
        $region22: #{tpu_custom_call.1} parent=19 // pred_check_branch
          %226 = sbr.rel (%p224) target = $region24
        $region23: #{tpu_custom_call.1} parent=19 // pred_region
          %s227 = sand.u32 %s68, 1
          %s228 = scalar_lea.sflag [#allocation3], %s227
          %s229 = sand.u32 %s68, 1
          %s230 = smul.addr %s229, 8
          %s231 = scalar_lea.vmem [#allocation6], %s230
          %s233 = ssub.s32 128, 128
          %234 = vsyncadd %s228, %s233
          %s235 = smul.addr %s32, 2
          %s236 = smul.addr %s235, 64
          %s237 = scalar_lea.hbm %s1, %s236
          %s238 = sshll.u32 %s231, 4
          %s239 = int_to_ptr.vmem [resolvable:$true] %s238
          %244 = dma.hbm_to_vmem [thread:$0]  %s237, 128, %s239, %s228, 64, 64, 4
        $region24: #{tpu_custom_call.1} parent=19 // pred_fallthru
          _
        // Predicated region
        $region25: #{tpu_custom_call.1} parent=19 // pred_check
          %p245 = pneg %p104
        $region26: #{tpu_custom_call.1} parent=19 // pred_check_branch
          %247 = sbr.rel (%p245) target = $region28
        $region27: #{tpu_custom_call.1} parent=19 // pred_region
          %s248 = sand.u32 %s94, 1
          %s249 = scalar_lea.sflag [#allocation8], %s248
          %s250 = sand.u32 %s94, 1
          %s251 = smul.addr %s250, 8
          %s252 = scalar_lea.vmem [#allocation7], %s251
          %s254 = ssub.s32 128, 128
          %255 = vsyncadd %s249, %s254
          %s256 = smul.addr %s32, 2
          %s257 = smul.addr %s256, 64
          %s258 = scalar_lea.hbm %s2, %s257
          %s259 = sshll.u32 %s252, 4
          %s260 = int_to_ptr.vmem [resolvable:$true] %s259
          %265 = dma.hbm_to_vmem [thread:$0]  %s258, 128, %s260, %s249, 64, 64, 4
        $region28: #{tpu_custom_call.1} parent=19 // pred_fallthru
          _
        // Predicated region
        $region29: #{tpu_custom_call.1} parent=19 // pred_check
          %p266 = pneg %p132
        $region30: #{tpu_custom_call.1} parent=19 // pred_check_branch
          %268 = sbr.rel (%p266) target = $region32
        $region31: #{tpu_custom_call.1} parent=19 // pred_region
          %p269 = scmp.lt.s32.totalorder %s32, 1
          %s270 = scalar_select %p269, %s32, 1
          %p271 = scmp.lt.s32.totalorder %s33, 1
          %s272 = scalar_select %p271, %s33, 1
          %s273 = smul.addr %s270, 2
          %s274 = sadd.s32 %s272, %s273
          %s275 = scalar_lea.vmem %s3, %s274
        $region32: #{tpu_custom_call.1} parent=19 // pred_fallthru
          _
      $region20: #{tpu_custom_call.1} parent=5 // pred_fallthru
        _
      %p276 = scmp.le.s32.totalorder 1, %s25
      %p277 = scmp.lt.s32.totalorder %s25, 5
      %p278 = pnand %p276, %p277
      %p279 = pneg %p278
      // Predicated region
      $region33: #{tpu_custom_call.1} parent=5 // pred_check
        _
      $region34: #{tpu_custom_call.1} parent=5 // pred_check_branch
        %281 = sbr.rel (%p278) target = $region36
      $region35: #{tpu_custom_call.1} parent=5 // pred_region
        %s282 = ssub.s32 %s25, 1
        // Predicated region
        $region37: #{tpu_custom_call.1} parent=35 // pred_check
          %p283 = pneg %p58
        $region38: #{tpu_custom_call.1} parent=35 // pred_check_branch
          %285 = sbr.rel (%p283) target = $region40
        $region39: #{tpu_custom_call.1} parent=35 // pred_region
          %286 = dma.done [#allocation5], 32
        $region40: #{tpu_custom_call.1} parent=35 // pred_fallthru
          _
        %s287 = sand.u32 %s71, 1
        %s288 = scalar_lea.sflag [#allocation3], %s287
        %s289 = sand.u32 %s71, 1
        %s290 = smul.addr %s289, 8
        %s291 = scalar_lea.vmem [#allocation6], %s290
        // Predicated region
        $region41: #{tpu_custom_call.1} parent=35 // pred_check
          %p292 = pneg %p84
        $region42: #{tpu_custom_call.1} parent=35 // pred_check_branch
          %294 = sbr.rel (%p292) target = $region44
        $region43: #{tpu_custom_call.1} parent=35 // pred_region
          %295 = dma.done %s288, 128
        $region44: #{tpu_custom_call.1} parent=35 // pred_fallthru
          _
        %s296 = sand.u32 %s97, 1
        %s297 = scalar_lea.sflag [#allocation8], %s296
        %s298 = sand.u32 %s97, 1
        %s299 = smul.addr %s298, 8
        %s300 = scalar_lea.vmem [#allocation7], %s299
        // Predicated region
        $region45: #{tpu_custom_call.1} parent=35 // pred_check
          %p301 = pneg %p110
        $region46: #{tpu_custom_call.1} parent=35 // pred_check_branch
          %303 = sbr.rel (%p301) target = $region48
        $region47: #{tpu_custom_call.1} parent=35 // pred_region
          %304 = dma.done %s297, 128
        $region48: #{tpu_custom_call.1} parent=35 // pred_fallthru
          _
        %305 = sfence
        %p306 = pneg %p58
        %p307 = pneg %p55
        %s308 = sand.u32 %s71, 1
        %s309 = scalar_lea.sflag [#allocation3], %s308
        %s310 = sand.u32 %s71, 1
        %s311 = smul.addr %s310, 8
        %s312 = scalar_lea.vmem [#allocation6], %s311
        %p313 = pneg %p84
        %p314 = pneg %p81
        %s315 = sand.u32 %s97, 1
        %s316 = scalar_lea.sflag [#allocation8], %s315
        %s317 = sand.u32 %s97, 1
        %s318 = smul.addr %s317, 8
        %s319 = scalar_lea.vmem [#allocation7], %s318
        %p320 = pneg %p110
        %p321 = pneg %p107
        %p322 = scmp.lt.s32.totalorder %s34, 1
        %s323 = scalar_select %p322, %s34, 1
        %p324 = scmp.lt.s32.totalorder %s35, 1
        %s325 = scalar_select %p324, %s35, 1
        %s326 = smul.addr %s323, 2
        %s327 = sadd.s32 %s325, %s326
        %s328 = scalar_lea.vmem %s3, %s327
        %p329 = pneg %p138
        %p330 = pneg %p135
        %p331 = pneg %p166
        %p332 = pneg %p163
        %s333 = sand.u32 %s153, 1
        %s334 = scalar_lea.sflag [#allocation4], %s333
        %s335 = sand.u32 %s153, 1
        %s336 = scalar_lea.vmem [#allocation9], %s335
        %p337 = pneg %p194
        %p338 = pneg %p191
        %s339 = sand.u32 %s181, 1
        %s340 = scalar_lea.sflag [#allocation11], %s339
        %s341 = sand.u32 %s181, 1
        %s342 = scalar_lea.vmem [#allocation10], %s341
        %p343 = scmp.lt.s32.totalorder %s34, 1
        %s344 = scalar_select %p343, %s34, 1
        %p345 = scmp.lt.s32.totalorder %s35, 1
        %s346 = scalar_select %p345, %s35, 1
        %s347 = smul.addr %s344, 2
        %s348 = sadd.s32 %s346, %s347
        %s349 = scalar_lea.vmem %s3, %s348
        %s351 = smul.u32 %s34, 128
        %s352 = sld [smem:[#allocation2 + %s351]]
        %s353 = sadd.s32 %s351, 1
        %s354 = sld [smem:[#allocation2 + %s353]]
        %s355 = sadd.s32 %s351, 2
        %s356 = sld [smem:[#allocation2 + %s355]]
        %s357 = sadd.s32 %s351, 3
        %s358 = sld [smem:[#allocation2 + %s357]]
        %s359 = sadd.s32 %s351, 4
        %s360 = sld [smem:[#allocation2 + %s359]]
        %s361 = sadd.s32 %s351, 5
        %s362 = sld [smem:[#allocation2 + %s361]]
        %s363 = sadd.s32 %s351, 6
        %s364 = sld [smem:[#allocation2 + %s363]]
        %s365 = sadd.s32 %s351, 7
        %s366 = sld [smem:[#allocation2 + %s365]]
        %s367 = sadd.s32 %s351, 8
        %s368 = sld [smem:[#allocation2 + %s367]]
        %s369 = sadd.s32 %s351, 9
        %s370 = sld [smem:[#allocation2 + %s369]]
        %s371 = sadd.s32 %s351, 10
        %s372 = sld [smem:[#allocation2 + %s371]]
        %s373 = sadd.s32 %s351, 11
        %s374 = sld [smem:[#allocation2 + %s373]]
        %s375 = smul.u32 %s35, 128
        %v376 = vlaneseq
        %v377 = vand.u32 %v376, 127
        %v378 = vstv %s375
        %v379 = vadd.s32 %v377, %v378
        %v380 = vcvt.s32.f32 %v379
        %v381 = vmul.f32 %v380, 0.028571429
        %v382 = vfloor.f32 %v381
        %v383 = vcvt.f32.s32.to.zero.pseudo %v382
        %v384 = vmul.u32 %v383, 35
        %v385 = vsub.s32 %v379, %v384
        %vm386 = vcmp.ge.s32.totalorder %v385, 35
        %v387 = vadd.s32 %v383, 1
        %vm388 = vcmp.lt.s32.totalorder %v385, 0
        %v389 = vsub.s32 %v383, 1
        %v390 = vsel %vm388, %v389, %v383
        %v391 = vsel %vm386, %v387, %v390
        %v392 = vmul.u32 %v391, 35
        %v393 = vsub.s32 %v379, %v392
        %v394 = vcvt.s32.f32 %v393
        %v395 = vmul.f32 %v394, 0.14285715
        %v396 = vfloor.f32 %v395
        %v397 = vcvt.f32.s32.to.zero.pseudo %v396
        %v398 = vmul.u32 %v397, 7
        %v399 = vsub.s32 %v393, %v398
        %vm400 = vcmp.ge.s32.totalorder %v399, 7
        %v401 = vadd.s32 %v397, 1
        %vm402 = vcmp.lt.s32.totalorder %v399, 0
        %v403 = vsub.s32 %v397, 1
        %v404 = vsel %vm402, %v403, %v397
        %v405 = vsel %vm400, %v401, %v404
        %v406 = vmul.u32 %v405, 7
        %v407 = vsub.s32 %v393, %v406
        %v408 = vcvt.s32.f32 %v391
        %v409 = vadd.f32 %v408, 0.5
        %v410 = vmul.f32 %v409, 0.25
        %v411 = vadd.f32 %v410, -1.0
        %v412 = vcvt.s32.f32 %v405
        %v413 = vadd.f32 %v412, 0.5
        %v414 = vmul.f32 %v413, 0.25
        %v415 = vadd.f32 %v414, -1.0
        %v416 = vcvt.s32.f32 %v407
        %v417 = vadd.f32 %v416, 0.5
        %v418 = vmul.f32 %v417, 0.25
        %v419 = vadd.f32 %v418, 0.0
        %v420 = vstv %s352
        %v421 = vmul.f32 %v420, %v411
        %v422 = vstv %s354
        %v423 = vmul.f32 %v422, %v415
        %v424 = vadd.f32 %v421, %v423
        %v425 = vstv %s356
        %v426 = vmul.f32 %v425, %v419
        %v427 = vadd.f32 %v424, %v426
        %v428 = vstv %s358
        %v429 = vadd.f32 %v427, %v428
        %v430 = vstv %s360
        %v431 = vmul.f32 %v430, %v411
        %v432 = vstv %s362
        %v433 = vmul.f32 %v432, %v415
        %v434 = vadd.f32 %v431, %v433
        %v435 = vstv %s364
        %v436 = vmul.f32 %v435, %v419
        %v437 = vadd.f32 %v434, %v436
        %v438 = vstv %s366
        %v439 = vadd.f32 %v437, %v438
        %v440 = vstv %s368
        %v441 = vmul.f32 %v440, %v411
        %v442 = vstv %s370
        %v443 = vmul.f32 %v442, %v415
        %v444 = vadd.f32 %v441, %v443
        %v445 = vstv %s372
        %v446 = vmul.f32 %v445, %v419
        %v447 = vadd.f32 %v444, %v446
        %v448 = vstv %s374
        %v449 = vadd.f32 %v447, %v448
        %v450 = vmax.f32 %v449, 1e-06
        %v451 = vmul.f32 %v429, 13.856406
        %v452 = vrcp.pop %v450
        %v453 = vmul.f32 %v451, %v452
        %v454 = vadd.f32 %v453, 8.0
        %v455 = vmul.f32 %v439, 13.856406
        %v456 = vmul.f32 %v455, %v452
        %v457 = vadd.f32 %v456, 8.0
        %vm458 = vcmp.gt.f32.partialorder %v454, 0.0
        %vm459 = vcmp.lt.f32.partialorder %v454, 16.0
        %vm460 = vmand %vm458, %vm459
        %vm461 = vcmp.gt.f32.partialorder %v457, 0.0
        %vm462 = vmand %vm460, %vm461
        %vm463 = vcmp.lt.f32.partialorder %v457, 16.0
        %vm464 = vmand %vm462, %vm463
        %vm465 = vcmp.gt.f32.partialorder %v449, 0.0
        %vm466 = vmand %vm464, %vm465
        %v467 = vsel %vm466, %v454, 0.0
        %v468 = vcvt.f32.s32.to.zero.pseudo %v467
        %v469 = vsel %vm466, %v457, 0.0
        %v470 = vcvt.f32.s32.to.zero.pseudo %v469
        %v471 = vld [vmem:[%s291] sm:$0xf]
        %v472 = vld [vmem:[%s291 + $0x4] sm:$0xf]
        %v473 = vld [vmem:[%s300] sm:$0xf]
        %v474 = vld [vmem:[%s300 + $0x4] sm:$0xf]
        %v475 = vlaneseq
        %v476 = vshrl.u32 %v475, 7
        %v477 = vadd.s32 %v476, 8
        %v478 = vadd.s32 %v476, 16
        %v479 = vadd.s32 %v476, 24
        %v480 = vadd.s32 %v476, 32
        %v481 = vadd.s32 %v476, 40
        %v482 = vadd.s32 %v476, 48
        %v483 = vadd.s32 %v476, 56
        %v484 = vadd.s32 %v476, 64
        %v485 = vadd.s32 %v476, 72
        %v486 = vadd.s32 %v476, 80
        %v487 = vadd.s32 %v476, 88
        %v488 = vadd.s32 %v476, 96
        %v489 = vadd.s32 %v476, 104
        %v490 = vadd.s32 %v476, 112
        %v491 = vadd.s32 %v476, 120
        %vm492 = vcmp.eq.s32.totalorder %v476, %v468
        %vm493 = vcmp.eq.s32.totalorder %v477, %v468
        %vm494 = vcmp.eq.s32.totalorder %v478, %v468
        %vm495 = vcmp.eq.s32.totalorder %v479, %v468
        %vm496 = vcmp.eq.s32.totalorder %v480, %v468
        %vm497 = vcmp.eq.s32.totalorder %v481, %v468
        %vm498 = vcmp.eq.s32.totalorder %v482, %v468
        %vm499 = vcmp.eq.s32.totalorder %v483, %v468
        %vm500 = vcmp.eq.s32.totalorder %v484, %v468
        %vm501 = vcmp.eq.s32.totalorder %v485, %v468
        %vm502 = vcmp.eq.s32.totalorder %v486, %v468
        %vm503 = vcmp.eq.s32.totalorder %v487, %v468
        %vm504 = vcmp.eq.s32.totalorder %v488, %v468
        %vm505 = vcmp.eq.s32.totalorder %v489, %v468
        %vm506 = vcmp.eq.s32.totalorder %v490, %v468
        %vm507 = vcmp.eq.s32.totalorder %v491, %v468
        %v508 = vsel %vm492, 1, 0
        %v509 = vsel %vm493, 1, 0
        %v510 = vsel %vm494, 1, 0
        %v511 = vsel %vm495, 1, 0
        %v512 = vsel %vm496, 1, 0
        %v513 = vsel %vm497, 1, 0
        %v514 = vsel %vm498, 1, 0
        %v515 = vsel %vm499, 1, 0
        %v516 = vsel %vm500, 1, 0
        %v517 = vsel %vm501, 1, 0
        %v518 = vsel %vm502, 1, 0
        %v519 = vsel %vm503, 1, 0
        %v520 = vsel %vm504, 1, 0
        %v521 = vsel %vm505, 1, 0
        %v522 = vsel %vm506, 1, 0
        %v523 = vsel %vm507, 1, 0
        %v524 = vcvt.s32.f32 %v508
        %v525 = vcvt.s32.f32 %v509
        %v526 = vcvt.s32.f32 %v510
        %v527 = vcvt.s32.f32 %v511
        %v528 = vcvt.s32.f32 %v512
        %v529 = vcvt.s32.f32 %v513
        %v530 = vcvt.s32.f32 %v514
        %v531 = vcvt.s32.f32 %v515
        %v532 = vcvt.s32.f32 %v516
        %v533 = vcvt.s32.f32 %v517
        %v534 = vcvt.s32.f32 %v518
        %v535 = vcvt.s32.f32 %v519
        %v536 = vcvt.s32.f32 %v520
        %v537 = vcvt.s32.f32 %v521
        %v538 = vcvt.s32.f32 %v522
        %v539 = vcvt.s32.f32 %v523
        %v540 = vpack.c.bf16 %v525, %v524
        %v541 = vpack.c.bf16 %v527, %v526
        %v542 = vpack.c.bf16 %v529, %v528
        %v543 = vpack.c.bf16 %v531, %v530
        %v544 = vpack.c.bf16 %v533, %v532
        %v545 = vpack.c.bf16 %v535, %v534
        %v546 = vpack.c.bf16 %v537, %v536
        %v547 = vpack.c.bf16 %v539, %v538
        %v550 = vunpack.c.l.b16 %v473
        %v551 = vunpack.c.l.b16 %v474
        %v552 = vpack.c.b16 %v551, %v550
        %554 = vmatprep.subr.bf16.mxu0 0
        %555 = vmatpush1.bf16.msra.mxu0 %v540
        %556 = vmatprep.subr.bf16.mxu0 0
        %557 = vmatpush1.bf16.msra.mxu0 %v541
        %558 = vmatprep.subr.bf16.mxu0 0
        %559 = vmatpush1.bf16.msra.mxu0 %v542
        %560 = vmatprep.subr.bf16.mxu0 0
        %561 = vmatpush1.bf16.msra.mxu0 %v543
        %562 = vmatprep.subr.bf16.mxu0 0
        %563 = vmatpush1.bf16.msra.mxu0 %v544
        %564 = vmatprep.subr.bf16.mxu0 0
        %565 = vmatpush1.bf16.msra.mxu0 %v545
        %566 = vmatprep.subr.bf16.mxu0 0
        %567 = vmatpush1.bf16.msra.mxu0 %v546
        %568 = vmatprep.subr.bf16.mxu0 0
        %569 = vmatpush1.bf16.msra.mxu0 %v547
        %570 = vmatprep.subr.bf16.mxu0 0
        %571 = vmatpush1.bf16.msra.mxu0 0
        %572 = vmatprep.subr.bf16.mxu0 0
        %573 = vmatpush1.bf16.msra.mxu0 0
        %574 = vmatprep.subr.bf16.mxu0 0
        %575 = vmatpush1.bf16.msra.mxu0 0
        %576 = vmatprep.subr.bf16.mxu0 0
        %577 = vmatpush1.bf16.msra.mxu0 0
        %578 = vmatprep.subr.bf16.mxu0 0
        %579 = vmatpush1.bf16.msra.mxu0 0
        %580 = vmatprep.subr.bf16.mxu0 0
        %581 = vmatpush1.bf16.msra.mxu0 0
        %582 = vmatprep.subr.bf16.mxu0 0
        %583 = vmatpush1.bf16.msra.mxu0 0
        %584 = vmatprep.subr.bf16.mxu0 0
        %585 = vmatpush1.bf16.msra.mxu0 0
        %586 = vmatprep.mubr.bf16.mxu0 0
        %587 = vmatmul.mubr.bf16.gmra.mrb[0].mxu0 %v552
        %v588 = vpop.f32.mrb[0].mxu0
        %v589 = vadd.f32 0.0, %v588
        %v590 = vpop.f32.mrb[0].mxu0
        %v591 = vpop.f32.mrb[0].mxu0
        %v592 = vadd.f32 0.0, %v591
        %v593 = vpop.f32.mrb[0].mxu0
        %594 = vdwg.mxu0
        %v597 = vunpack.c.l.b16 %v471
        %v598 = vunpack.c.l.b16 %v472
        %v599 = vpack.c.b16 %v598, %v597
        %601 = vmatprep.subr.bf16.mxu0 0
        %602 = vmatpush1.bf16.msra.mxu0 %v540
        %603 = vmatprep.subr.bf16.mxu0 0
        %604 = vmatpush1.bf16.msra.mxu0 %v541
        %605 = vmatprep.subr.bf16.mxu0 0
        %606 = vmatpush1.bf16.msra.mxu0 %v542
        %607 = vmatprep.subr.bf16.mxu0 0
        %608 = vmatpush1.bf16.msra.mxu0 %v543
        %609 = vmatprep.subr.bf16.mxu0 0
        %610 = vmatpush1.bf16.msra.mxu0 %v544
        %611 = vmatprep.subr.bf16.mxu0 0
        %612 = vmatpush1.bf16.msra.mxu0 %v545
        %613 = vmatprep.subr.bf16.mxu0 0
        %614 = vmatpush1.bf16.msra.mxu0 %v546
        %615 = vmatprep.subr.bf16.mxu0 0
        %616 = vmatpush1.bf16.msra.mxu0 %v547
        %617 = vmatprep.subr.bf16.mxu0 0
        %618 = vmatpush1.bf16.msra.mxu0 0
        %619 = vmatprep.subr.bf16.mxu0 0
        %620 = vmatpush1.bf16.msra.mxu0 0
        %621 = vmatprep.subr.bf16.mxu0 0
        %622 = vmatpush1.bf16.msra.mxu0 0
        %623 = vmatprep.subr.bf16.mxu0 0
        %624 = vmatpush1.bf16.msra.mxu0 0
        %625 = vmatprep.subr.bf16.mxu0 0
        %626 = vmatpush1.bf16.msra.mxu0 0
        %627 = vmatprep.subr.bf16.mxu0 0
        %628 = vmatpush1.bf16.msra.mxu0 0
        %629 = vmatprep.subr.bf16.mxu0 0
        %630 = vmatpush1.bf16.msra.mxu0 0
        %631 = vmatprep.subr.bf16.mxu0 0
        %632 = vmatpush1.bf16.msra.mxu0 0
        %633 = vmatprep.mubr.bf16.mxu0 0
        %634 = vmatmul.mubr.bf16.gmra.mrb[0].mxu0 %v599
        %v635 = vpop.f32.mrb[0].mxu0
        %v636 = vadd.f32 %v589, %v635
        %v637 = vpop.f32.mrb[0].mxu0
        %v638 = vpop.f32.mrb[0].mxu0
        %v639 = vadd.f32 %v592, %v638
        %v640 = vpop.f32.mrb[0].mxu0
        %641 = vdwg.mxu0
        %vm642 = vcmp.eq.s32.totalorder %v476, %v470
        %vm643 = vcmp.eq.s32.totalorder %v477, %v470
        %v644 = vsel %vm642, %v636, 0.0
        %v645 = vsel %vm643, %v639, 0.0
        %v646 = vadd.f32 %v644, %v645
        %v647 = vrot.slane %v646, 4
        %v648 = vadd.f32 %v646, %v647
        %v649 = vrot.slane %v648, 2
        %v650 = vadd.f32 %v648, %v649
        %v651 = vrot.slane %v650, 1
        %v652 = vadd.f32 %v650, %v651
        %v653 = vadd.f32 %v652, 0.125
        %vm654 = vcmp.le.f32.partialorder %v449, %v653
        %vm655 = vmand %vm654, %vm466
        %v656 = vsel %vm655, 1, 0
        %v657 = vcvt.s32.f32 %v656
        %v658 = vld [vmem:[%s349] sm:$0x1]
        %v659 = vunpack.c.0.s8 %v658
        %v660 = vcvt.s32.f32 %v659
        %v661 = vmax.f32 %v657, %v660
        %662 = vst [vmem:[%s336] sm:$0x1] %v661
        %663 = vst [vmem:[%s342] sm:$0x1] %v652
        %s664 = sand.u32 %s153, 1
        %s665 = scalar_lea.sflag [#allocation4], %s664
        %s666 = sand.u32 %s153, 1
        %s667 = scalar_lea.vmem [#allocation9], %s666
        %s668 = sand.u32 %s181, 1
        %s669 = scalar_lea.sflag [#allocation11], %s668
        %s670 = sand.u32 %s181, 1
        %s671 = scalar_lea.vmem [#allocation10], %s670
        // Predicated region
        $region49: #{tpu_custom_call.1} parent=35 // pred_check
          %p672 = pneg %p163
        $region50: #{tpu_custom_call.1} parent=35 // pred_check_branch
          %674 = sbr.rel (%p672) target = $region52
        $region51: #{tpu_custom_call.1} parent=35 // pred_region
          %s676 = ssub.s32 16, 16
          %677 = vsyncadd %s665, %s676
          %s678 = smul.addr %s34, 2
          %s679 = sadd.s32 %s35, %s678
          %s680 = smul.addr %s679, 16
          %s681 = scalar_lea.hbm %s4, %s680
          %s683 = sshll.u32 %s667, 4
          %s684 = int_to_ptr.vmem [resolvable:$true] %s683
          %686 = dma.vmem_to_hbm [thread:$0]  %s684, 16, %s681, %s665
        $region52: #{tpu_custom_call.1} parent=35 // pred_fallthru
          _
        // Predicated region
        $region53: #{tpu_custom_call.1} parent=35 // pred_check
          %p687 = pneg %p191
        $region54: #{tpu_custom_call.1} parent=35 // pred_check_branch
          %689 = sbr.rel (%p687) target = $region56
        $region55: #{tpu_custom_call.1} parent=35 // pred_region
          %s691 = ssub.s32 16, 16
          %692 = vsyncadd %s669, %s691
          %s693 = smul.addr %s34, 2
          %s694 = sadd.s32 %s35, %s693
          %s695 = smul.addr %s694, 16
          %s696 = scalar_lea.hbm %s5, %s695
          %s698 = sshll.u32 %s671, 4
          %s699 = int_to_ptr.vmem [resolvable:$true] %s698
          %701 = dma.vmem_to_hbm [thread:$0]  %s699, 16, %s696, %s669
        $region56: #{tpu_custom_call.1} parent=35 // pred_fallthru
          _
      $region36: #{tpu_custom_call.1} parent=5 // pred_fallthru
        _
      %p702 = scmp.le.s32.totalorder 2, %s25
      // Predicated region
      $region57: #{tpu_custom_call.1} parent=5 // pred_check
        %p703 = pneg %p702
      $region58: #{tpu_custom_call.1} parent=5 // pred_check_branch
        %705 = sbr.rel (%p703) target = $region60
      $region59: #{tpu_custom_call.1} parent=5 // pred_region
        %s706 = ssub.s32 %s25, 2
        // Predicated region
        $region61: #{tpu_custom_call.1} parent=59 // pred_check
          %p707 = pneg %p169
        $region62: #{tpu_custom_call.1} parent=59 // pred_check_branch
          %709 = sbr.rel (%p707) target = $region64
        $region63: #{tpu_custom_call.1} parent=59 // pred_region
          %s710 = sand.u32 %s154, 1
          %s711 = scalar_lea.sflag [#allocation4], %s710
          %s712 = sand.u32 %s154, 1
          %s713 = scalar_lea.vmem [#allocation9], %s712
          %714 = dma.done %s711, 16
        $region64: #{tpu_custom_call.1} parent=59 // pred_fallthru
          _
        // Predicated region
        $region65: #{tpu_custom_call.1} parent=59 // pred_check
          %p715 = pneg %p197
        $region66: #{tpu_custom_call.1} parent=59 // pred_check_branch
          %717 = sbr.rel (%p715) target = $region68
        $region67: #{tpu_custom_call.1} parent=59 // pred_region
          %s718 = sand.u32 %s182, 1
          %s719 = scalar_lea.sflag [#allocation11], %s718
          %s720 = sand.u32 %s182, 1
          %s721 = scalar_lea.vmem [#allocation10], %s720
          %722 = dma.done %s719, 16
        $region68: #{tpu_custom_call.1} parent=59 // pred_fallthru
          _
      $region60: #{tpu_custom_call.1} parent=5 // pred_fallthru
        _
    $region6: #{tpu_custom_call.1} parent=1 // loop_footer
      %s29 = sadd.s32 1, %s25
    $region7: #{tpu_custom_call.1} parent=1 // loop_footer_branch
      %24 = sbr.rel target = $region3
    $region8: #{tpu_custom_call.1} parent=1 // loop_exit
      _
    %723 = vsyncpa [#allocation3], 1
    %s724 = scalar_lea.sflag [#allocation3], 1
    %725 = vsyncpa %s724, 1
    %726 = vsyncpa [#allocation8], 1
    %s727 = scalar_lea.sflag [#allocation8], 1
    %728 = vsyncpa %s727, 1
    %729 = vsyncpa [#allocation4], 1
    %s730 = scalar_lea.sflag [#allocation4], 1
    %731 = vsyncpa %s730, 1
    %732 = vsyncpa [#allocation11], 1
    %s733 = scalar_lea.sflag [#allocation11], 1
    %734 = vsyncpa %s733, 1
    %735 = vsyncpa [#allocation5], 1
    %s736 = scalar_lea.sflag [#allocation5], 1
    %737 = vsyncpa %s736, 1

</llo_original>
